<compile_context>
chip_gen: v5e
topology: v5e:2x2
jax: 0.10.0
libtpu: 0.0.40
codegen_flags: <defaults>
</compile_context>

<pallas_src>
import numpy as np
import jax
import jax.numpy as jnp
from jax.experimental import pallas as pl
from jax.experimental.pallas import tpu as pltpu


def la_kernel(x_ref, pmean_ref, psel_ref, mup_ref, g_ref, e_ref, bias_ref,
              scal_ref, out_ref):
    """One grid step: gate a (TB*H, Cc, 196) slab of activations.

    x_ref    : (TB*H, Cc, 196) streamed activations (native dtype, e.g. bf16)
    pmean_ref: (196, 49)   2x2 average-pool matrix (includes the 1/(4*Cc))
    psel_ref : (196, 196)  2x2 max-pool phase-selection matrix (4 x 49 columns)
    mup_ref  : (49, 196)   bilinear 7x7 -> 14x14 upsample (align_corners=False)
    g_ref    : (TB, TB*H)  block-diagonal f1 weights (w1 per head)
    e_ref    : (TB*H, TB)  block-diagonal f2 weights (w2 per head)
    bias_ref : (TB*H, 1)   (v0+v1)*b2[h] + vb, tiled per batch row-group
    scal_ref : (3,) SMEM   [b1, v0, v1]
    out_ref  : (TB*H, Cc, 196) gated output (same dtype as x)
    """
    b1 = scal_ref[0]
    v0 = scal_ref[1]
    v1 = scal_ref[2]

    xf = x_ref[...].astype(jnp.float32)                   # widen in-register

    # --- fused per-(batch, head) patch statistics (no second HBM pass) -------
    ch_sum = jnp.sum(xf, axis=1)                           # (TB*H, 196)
    ch_max = jnp.max(xf, axis=1)                           # (TB*H, 196)

    # 2x2 mean-pool (channel mean folded in): one averaging matmul.
    mean49 = jnp.dot(ch_sum, pmean_ref[...],
                     preferred_element_type=jnp.float32)   # (TB*H, 49)

    # 2x2 max-pool: extract the 4 spatial phases with one exact 0/1 selection
    # matmul, then elementwise max of the four 49-wide slabs.
    ph = jnp.dot(ch_max, psel_ref[...],
                 preferred_element_type=jnp.float32)       # (TB*H, 4*49)
    max49 = jnp.maximum(jnp.maximum(ph[:, 0:49], ph[:, 49:98]),
                        jnp.maximum(ph[:, 98:147], ph[:, 147:196]))

    # --- f1 (1x1 conv over heads) + ReLU, then the v-fusion fold --------------
    g = g_ref[...]
    s_mean = jnp.maximum(
        jnp.dot(g, mean49, preferred_element_type=jnp.float32) + b1, 0.0)
    s_max = jnp.maximum(
        jnp.dot(g, max49, preferred_element_type=jnp.float32) + b1, 0.0)
    s_fused = v0 * s_mean + v1 * s_max                     # (TB, 49)

    # --- bilinear upsample at *batch* granularity (49 -> 196) -----------------
    s_up = jnp.dot(s_fused, mup_ref[...],
                   preferred_element_type=jnp.float32)     # (TB, 196)

    # --- f2 per-head scale + bias, expanded back to (TB*H, 196) ---------------
    # (upsample columns sum to 1, so the per-head bias commutes with it)
    fup = (jnp.dot(e_ref[...], s_up, preferred_element_type=jnp.float32)
           + bias_ref[...])                                # (TB*H, 196)

    # gate = 1 + sigmoid(fup): single EUP tanh, no VALU divide.
    gate = 1.5 + 0.5 * jnp.tanh(0.5 * fup)                 # (TB*H, 196)

    # out + x == x * (1 + sigmoid(fusion)); gate broadcast across Cc channels.
    out_ref[...] = (xf * gate[:, None, :]).astype(out_ref.dtype)


def _make_upsample_matrix():
    # PyTorch F.interpolate(..., (14,14), mode='bilinear', align_corners=False)
    U = np.zeros((14, 7), dtype=np.float32)
    for o in range(14):
        src = max(0.0, 0.5 * o - 0.25)
        i0 = min(int(np.floor(src)), 6)
        frac = src - i0
        i1 = i0 + 1 if i0 < 6 else i0
        U[o, i0] += 1.0 - frac
        U[o, i1] += frac
    # M[iy*7+ix, oy*14+ox] = U[oy, iy] * U[ox, ix]; column sums are 1.
    return np.einsum('ai,bj->ijab', U, U).reshape(49, 196).astype(np.float32)


def _make_pool_matrices(Cc):
    """Pmean: 196->49 2x2 average (with 1/(4*Cc)); Psel4: 196->4*49 selection."""
    pmean = np.zeros((196, 49), dtype=np.float32)
    psel = np.zeros((196, 196), dtype=np.float32)
    for i in range(7):
        for j in range(7):
            o = i * 7 + j
            for dy in range(2):
                for dx in range(2):
                    e = (2 * i + dy) * 14 + (2 * j + dx)
                    pmean[e, o] = 1.0 / (4.0 * Cc)
                    psel[e, (dy * 2 + dx) * 49 + o] = 1.0
    return pmean, psel


def _ceil_to(v, m):
    return -(-v // m) * m


def _vmem_bytes(tb, C, H, itemsize):
    """Approximate per-step VMEM footprint: streamed blocks (double-buffered),
    resident constants (double-buffered by the default pipeline) and the
    largest f32 in-kernel intermediates, including (sublane, lane) padding."""
    Cc = C // H
    rows = tb * H
    lane196 = _ceil_to(196, 128)                       # 256
    sub = 8 if itemsize >= 4 else 16 // itemsize       # sublane packing granule
    cc_pad = _ceil_to(Cc, sub)
    rows8 = _ceil_to(rows, 8)
    # streamed x-in + gated-out blocks, 2 pipeline buffers each
    stream = 2 * 2 * rows * cc_pad * lane196 * itemsize
    # resident constants (constant index_map, still counted with 2 buffers)
    const = 2 * 4 * (_ceil_to(196, 8) * 128            # Pmean
                     + _ceil_to(196, 8) * lane196      # Psel4
                     + _ceil_to(49, 8) * lane196       # Mup
                     + _ceil_to(tb, 8) * _ceil_to(rows, 128)   # G
                     + rows8 * _ceil_to(tb, 128)       # E
                     + rows8 * 128)                    # bias column
    # biggest transient f32 values inside the kernel
    interm = 4 * (2 * rows * _ceil_to(Cc, 8) * lane196     # f32 tile + gated tile
                  + 4 * rows8 * lane196)                   # ch_sum/max, phases, gate
    return stream + const + interm


def _pick_tile_b(B, C, H, itemsize, budget_bytes):
    """Largest divisor of B that fits the VMEM budget while keeping at least
    min(B, 4) grid steps (DMA/compute overlap + v7x megacore split)."""
    divisors = [d for d in range(1, B + 1) if B % d == 0]
    min_steps = min(B, 4)
    fitting = [d for d in divisors
               if _vmem_bytes(d, C, H, itemsize) <= budget_bytes]
    if not fitting:
        return 1
    stepped = [d for d in fitting if B // d >= min_steps]
    return max(stepped) if stepped else min(fitting)


def la_forward(x, params, num_heads, tile_b=None):
    w1, b1, w2, b2, vw, vb = params
    B, C, H14, W14 = x.shape
    assert H14 == 14 and W14 == 14 and C % num_heads == 0
    H = num_heads
    Cc = C // H
    dtype = x.dtype
    itemsize = jnp.dtype(dtype).itemsize

    # Streamed view: pure (free) reshape of NCHW; row group n = b*H + h.
    x3 = x.reshape(B * H, Cc, 196)

    try:
        vmem_cap = int(getattr(pltpu.get_tpu_info(), "vmem_capacity_bytes",
                               64 << 20))
    except Exception:                                   # pragma: no cover
        vmem_cap = 64 << 20                             # v7x-sized, conservative

    if tile_b is None:
        tile_b = _pick_tile_b(B, C, H, itemsize,
                              budget_bytes=min(20 << 20, vmem_cap // 3))
    TB = int(tile_b)
    if B % TB != 0:
        raise ValueError("tile_b must divide the batch size")
    TNh = TB * H

    f32 = jnp.float32
    pmean_np, psel_np = _make_pool_matrices(Cc)
    Pmean = jnp.asarray(pmean_np)                          # (196, 49)
    Psel = jnp.asarray(psel_np)                            # (196, 196)
    Mup = jnp.asarray(_make_upsample_matrix())             # (49, 196)

    eye_tb = jnp.eye(TB, dtype=f32)
    G = jnp.kron(eye_tb, w1.astype(f32)[None, :])          # (TB, TB*H)
    E = jnp.kron(eye_tb, w2.astype(f32)[:, None])          # (TB*H, TB)
    bias_col = jnp.tile(((vw[0] + vw[1]) * b2 + vb[0]).astype(f32),
                        (TB,))[:, None]                    # (TB*H, 1)
    scal = jnp.concatenate([b1, vw]).astype(f32)           # [b1, v0, v1]

    need = _vmem_bytes(TB, C, H, itemsize)
    vmem_limit = int(min(vmem_cap * 3 // 4, max(32 << 20, need + (8 << 20))))

    grid = (B // TB,)
    cost = pl.CostEstimate(
        flops=int(2 * B * H * 196 * (49 + 196)             # pooling matmuls
                  + 4 * B * TNh * 49                       # two f1 matmuls
                  + 2 * B * 49 * 196                       # upsample
                  + 2 * B * H * TB * 196                   # f2 expansion
                  + 6 * B * C * 196 + 8 * B * H * 196),    # reductions + gate
        transcendentals=int(B * H * 196),
        bytes_accessed=int(itemsize * 2 * B * C * 196
                           + 4 * (196 * 49 + 196 * 196 + 49 * 196
                                  + 2 * TB * TNh + TNh + 3)),
    )

    out3 = pl.pallas_call(
        la_kernel,
        out_shape=jax.ShapeDtypeStruct((B * H, Cc, 196), dtype),
        grid=grid,
        in_specs=[
            pl.BlockSpec((TNh, Cc, 196), lambda i: (i, 0, 0)),   # x (streamed)
            pl.BlockSpec((196, 49), lambda i: (0, 0)),           # Pmean (resident)
            pl.BlockSpec((196, 196), lambda i: (0, 0)),          # Psel4 (resident)
            pl.BlockSpec((49, 196), lambda i: (0, 0)),           # Mup   (resident)
            pl.BlockSpec((TB, TNh), lambda i: (0, 0)),           # G     (resident)
            pl.BlockSpec((TNh, TB), lambda i: (0, 0)),           # E     (resident)
            pl.BlockSpec((TNh, 1), lambda i: (0, 0)),            # bias  (resident)
            pl.BlockSpec(memory_space=pltpu.MemorySpace.SMEM),   # scalars
        ],
        out_specs=pl.BlockSpec((TNh, Cc, 196), lambda i: (i, 0, 0)),
        compiler_params=pltpu.CompilerParams(
            dimension_semantics=("parallel",),
            vmem_limit_bytes=vmem_limit),
        cost_estimate=cost,
    )(x3, Pmean, Psel, Mup, G, E, bias_col, scal)

    return out3.reshape(B, C, 14, 14)


def la_reference(x, params, num_heads):
    """Pure-JAX reference reproducing the PyTorch forward (for self-check)."""
    w1, b1, w2, b2, vw, vb = params
    B, C, _, _ = x.shape
    Cc = C // num_heads
    x5 = x.reshape(B, num_heads, Cc, 14, 14)
    p = x5.reshape(B, num_heads, Cc, 7, 2, 7, 2)
    mean = p.mean(axis=(2, 4, 6))                                  # (B,H,7,7)
    mx = p.max(axis=(2, 4, 6))                                     # (B,H,7,7)

    def head_mlp(z):
        s = jnp.einsum('h,bhij->bij', w1, z, precision='highest') + b1[0]
        s = jnp.maximum(s, 0.0)
        return w2[None, :, None, None] * s[:, None, :, :] + b2[None, :, None, None]

    zm = head_mlp(mean)
    zx = head_mlp(mx)
    fusion7 = vw[0] * zm + vw[1] * zx + vb[0]
    fup = jax.image.resize(fusion7, (B, num_heads, 14, 14), method='bilinear',
                           precision=jax.lax.Precision.HIGHEST)
    gate = 1.0 + jax.nn.sigmoid(fup)
    out = x5 * gate[:, :, None, :, :]
    return out.reshape(B, C, 14, 14)


if __name__ == "__main__":
    num_heads = 4          # small-config LA(num_heads=4)
    B, Cc = 4, 2
    C = num_heads * Cc     # channels must chunk evenly into num_heads groups

    key = jax.random.PRNGKey(0)
    ks = jax.random.split(key, 7)
    # deterministic synthetic parameters (shapes follow the nn.Conv2d defs)
    w1 = (jax.random.normal(ks[0], (num_heads,)) * 0.2).astype(jnp.float32)  # f1 w
    b1 = (jax.random.normal(ks[1], (1,)) * 0.1).astype(jnp.float32)          # f1 b
    w2 = (jax.random.normal(ks[2], (num_heads,)) * 0.2).astype(jnp.float32)  # f2 w
    b2 = (jax.random.normal(ks[3], (num_heads,)) * 0.1).astype(jnp.float32)  # f2 b
    vw = (jax.random.normal(ks[4], (2,)) * 0.5).astype(jnp.float32)          # v  w
    vb = (jax.random.normal(ks[5], (1,)) * 0.1).astype(jnp.float32)          # v  b
    params = (w1, b1, w2, b2, vw, vb)

    x = jax.random.normal(ks[6], (B, C, 14, 14), dtype=jnp.float32)
    ref = la_reference(x, params, num_heads)

    # f32 streaming, explicit multi-step grid: tile_b=2 -> grid=(2,).
    out_f32 = jax.block_until_ready(la_forward(x, params, num_heads, tile_b=2))
    np.testing.assert_allclose(np.asarray(out_f32), np.asarray(ref),
                               rtol=1e-2, atol=1e-2)

    # Native bf16 streaming + auto tile selection (TB=1 -> grid=(4,)).
    x_bf16 = x.astype(jnp.bfloat16)
    ref_bf16 = la_reference(x_bf16.astype(jnp.float32), params, num_heads)
    out_bf16 = jax.block_until_ready(la_forward(x_bf16, params, num_heads))
    np.testing.assert_allclose(np.asarray(out_bf16.astype(jnp.float32)),
                               np.asarray(ref_bf16), rtol=2e-2, atol=2e-2)

    print("KERNEL_OK")
</pallas_src>

<mosaic_0001>
module attributes {stable_mosaic.version = 11 : i64} {
  func.func @la_kernel(%arg0: i32, %arg1: memref<8x2x196xf32, #tpu.memory_space<vmem>>, %arg2: memref<196x49xf32, #tpu.memory_space<vmem>>, %arg3: memref<196x196xf32, #tpu.memory_space<vmem>>, %arg4: memref<49x196xf32, #tpu.memory_space<vmem>>, %arg5: memref<2x8xf32, #tpu.memory_space<vmem>>, %arg6: memref<8x2xf32, #tpu.memory_space<vmem>>, %arg7: memref<8x1xf32, #tpu.memory_space<vmem>>, %arg8: memref<3xf32, #tpu.memory_space<smem>>, %arg9: memref<8x2x196xf32, #tpu.memory_space<vmem>>) attributes {dimension_semantics = [#tpu.dimension_semantics<parallel>], iteration_bounds = array<i64: 2>, scalar_prefetch = 0 : i64, scratch_operands = 0 : i64, tpu.core_type = #tpu.core_type<tc>, window_params = [{transform_indices = @transform_0, window_bounds = array<i64: 8, 2, 196>}, {pipeline_mode = #tpu.pipeline_mode<synchronous>, transform_indices = @transform_1, window_bounds = array<i64: 196, 49>}, {pipeline_mode = #tpu.pipeline_mode<synchronous>, transform_indices = @transform_2, window_bounds = array<i64: 196, 196>}, {pipeline_mode = #tpu.pipeline_mode<synchronous>, transform_indices = @transform_3, window_bounds = array<i64: 49, 196>}, {pipeline_mode = #tpu.pipeline_mode<synchronous>, transform_indices = @transform_4, window_bounds = array<i64: 2, 8>}, {pipeline_mode = #tpu.pipeline_mode<synchronous>, transform_indices = @transform_5, window_bounds = array<i64: 8, 2>}, {pipeline_mode = #tpu.pipeline_mode<synchronous>, transform_indices = @transform_6, window_bounds = array<i64: 8, 1>}, {transform_indices = @transform_7, window_bounds = array<i64: 3>}, {transform_indices = @transform_8, window_bounds = array<i64: 8, 2, 196>}]} {
    %c0 = arith.constant 0 : index
    %0 = memref.load %arg8[%c0] : memref<3xf32, #tpu.memory_space<smem>>
    %c1 = arith.constant 1 : index
    %1 = memref.load %arg8[%c1] : memref<3xf32, #tpu.memory_space<smem>>
    %c2 = arith.constant 2 : index
    %2 = memref.load %arg8[%c2] : memref<3xf32, #tpu.memory_space<smem>>
    %c0_0 = arith.constant 0 : index
    %c0_1 = arith.constant 0 : index
    %c0_2 = arith.constant 0 : index
    %3 = vector.load %arg1[%c0_0, %c0_1, %c0_2] : memref<8x2x196xf32, #tpu.memory_space<vmem>>, vector<8x2x196xf32>
    %cst = arith.constant dense<0.000000e+00> : vector<8x196xf32>
    %4 = vector.multi_reduction <add>, %3, %cst [1] : vector<8x2x196xf32> to vector<8x196xf32>
    %cst_3 = arith.constant dense<0xFF800000> : vector<8x196xf32>
    %5 = vector.multi_reduction <maximumf>, %3, %cst_3 [1] : vector<8x2x196xf32> to vector<8x196xf32>
    %c0_4 = arith.constant 0 : index
    %c0_5 = arith.constant 0 : index
    %6 = vector.load %arg2[%c0_4, %c0_5] : memref<196x49xf32, #tpu.memory_space<vmem>>, vector<196x49xf32>
    %cst_6 = arith.constant dense<0.000000e+00> : vector<8x49xf32>
    %7 = tpu.matmul %4, %6, %cst_6 {dimension_numbers = #tpu.dot_dimension_numbers<[1], [0], [0], [1], [0, 0, 1, 1], [], []>} : vector<8x196xf32>, vector<196x49xf32>, vector<8x49xf32> -> vector<8x49xf32>
    %c0_7 = arith.constant 0 : index
    %c0_8 = arith.constant 0 : index
    %8 = vector.load %arg3[%c0_7, %c0_8] : memref<196x196xf32, #tpu.memory_space<vmem>>, vector<196x196xf32>
    %cst_9 = arith.constant dense<0.000000e+00> : vector<8x196xf32>
    %9 = tpu.matmul %5, %8, %cst_9 {dimension_numbers = #tpu.dot_dimension_numbers<[1], [0], [0], [1], [0, 0, 1, 1], [], []>} : vector<8x196xf32>, vector<196x196xf32>, vector<8x196xf32> -> vector<8x196xf32>
    %10 = vector.extract_strided_slice %9 {offsets = [0, 0], sizes = [8, 49], strides = [1, 1]} : vector<8x196xf32> to vector<8x49xf32>
    %11 = vector.extract_strided_slice %9 {offsets = [0, 49], sizes = [8, 49], strides = [1, 1]} : vector<8x196xf32> to vector<8x49xf32>
    %12 = arith.maximumf %10, %11 : vector<8x49xf32>
    %13 = vector.extract_strided_slice %9 {offsets = [0, 98], sizes = [8, 49], strides = [1, 1]} : vector<8x196xf32> to vector<8x49xf32>
    %14 = vector.extract_strided_slice %9 {offsets = [0, 147], sizes = [8, 49], strides = [1, 1]} : vector<8x196xf32> to vector<8x49xf32>
    %15 = arith.maximumf %13, %14 : vector<8x49xf32>
    %16 = arith.maximumf %12, %15 : vector<8x49xf32>
    %c0_10 = arith.constant 0 : index
    %c0_11 = arith.constant 0 : index
    %17 = vector.load %arg5[%c0_10, %c0_11] : memref<2x8xf32, #tpu.memory_space<vmem>>, vector<2x8xf32>
    %cst_12 = arith.constant dense<0.000000e+00> : vector<2x49xf32>
    %18 = tpu.matmul %17, %7, %cst_12 {dimension_numbers = #tpu.dot_dimension_numbers<[1], [0], [0], [1], [0, 0, 1, 1], [], []>} : vector<2x8xf32>, vector<8x49xf32>, vector<2x49xf32> -> vector<2x49xf32>
    %19 = vector.broadcast %0 : f32 to vector<2x49xf32>
    %20 = arith.addf %18, %19 : vector<2x49xf32>
    %cst_13 = arith.constant 0.000000e+00 : f32
    %21 = vector.broadcast %cst_13 : f32 to vector<2x49xf32>
    %22 = arith.maximumf %20, %21 : vector<2x49xf32>
    %cst_14 = arith.constant dense<0.000000e+00> : vector<2x49xf32>
    %23 = tpu.matmul %17, %16, %cst_14 {dimension_numbers = #tpu.dot_dimension_numbers<[1], [0], [0], [1], [0, 0, 1, 1], [], []>} : vector<2x8xf32>, vector<8x49xf32>, vector<2x49xf32> -> vector<2x49xf32>
    %24 = vector.broadcast %0 : f32 to vector<2x49xf32>
    %25 = arith.addf %23, %24 : vector<2x49xf32>
    %cst_15 = arith.constant 0.000000e+00 : f32
    %26 = vector.broadcast %cst_15 : f32 to vector<2x49xf32>
    %27 = arith.maximumf %25, %26 : vector<2x49xf32>
    %28 = vector.broadcast %1 : f32 to vector<2x49xf32>
    %29 = arith.mulf %28, %22 : vector<2x49xf32>
    %30 = vector.broadcast %2 : f32 to vector<2x49xf32>
    %31 = arith.mulf %30, %27 : vector<2x49xf32>
    %32 = arith.addf %29, %31 : vector<2x49xf32>
    %c0_16 = arith.constant 0 : index
    %c0_17 = arith.constant 0 : index
    %33 = vector.load %arg4[%c0_16, %c0_17] : memref<49x196xf32, #tpu.memory_space<vmem>>, vector<49x196xf32>
    %cst_18 = arith.constant dense<0.000000e+00> : vector<2x196xf32>
    %34 = tpu.matmul %32, %33, %cst_18 {dimension_numbers = #tpu.dot_dimension_numbers<[1], [0], [0], [1], [0, 0, 1, 1], [], []>} : vector<2x49xf32>, vector<49x196xf32>, vector<2x196xf32> -> vector<2x196xf32>
    %c0_19 = arith.constant 0 : index
    %c0_20 = arith.constant 0 : index
    %35 = vector.load %arg6[%c0_19, %c0_20] : memref<8x2xf32, #tpu.memory_space<vmem>>, vector<8x2xf32>
    %cst_21 = arith.constant dense<0.000000e+00> : vector<8x196xf32>
    %36 = tpu.matmul %35, %34, %cst_21 {dimension_numbers = #tpu.dot_dimension_numbers<[1], [0], [0], [1], [0, 0, 1, 1], [], []>} : vector<8x2xf32>, vector<2x196xf32>, vector<8x196xf32> -> vector<8x196xf32>
    %c0_22 = arith.constant 0 : index
    %c0_23 = arith.constant 0 : index
    %37 = vector.load %arg7[%c0_22, %c0_23] : memref<8x1xf32, #tpu.memory_space<vmem>>, vector<8x1xf32>
    %38 = vector.broadcast %37 : vector<8x1xf32> to vector<8x196xf32>
    %39 = arith.addf %36, %38 : vector<8x196xf32>
    %cst_24 = arith.constant 5.000000e-01 : f32
    %40 = vector.broadcast %cst_24 : f32 to vector<8x196xf32>
    %41 = arith.mulf %40, %39 : vector<8x196xf32>
    %42 = math.tanh %41 : vector<8x196xf32>
    %cst_25 = arith.constant 5.000000e-01 : f32
    %43 = vector.broadcast %cst_25 : f32 to vector<8x196xf32>
    %44 = arith.mulf %43, %42 : vector<8x196xf32>
    %cst_26 = arith.constant 1.500000e+00 : f32
    %45 = vector.broadcast %cst_26 : f32 to vector<8x196xf32>
    %46 = arith.addf %45, %44 : vector<8x196xf32>
    %47 = vector.shape_cast %46 : vector<8x196xf32> to vector<8x1x196xf32>
    %48 = vector.broadcast %47 : vector<8x1x196xf32> to vector<8x2x196xf32>
    %49 = arith.mulf %3, %48 : vector<8x2x196xf32>
    %c0_27 = arith.constant 0 : index
    %c0_28 = arith.constant 0 : index
    %c0_29 = arith.constant 0 : index
    %50 = vector.load %arg9[%c0_27, %c0_28, %c0_29] : memref<8x2x196xf32, #tpu.memory_space<vmem>>, vector<8x2x196xf32>
    tpu.vector_store %arg9[%c0_27, %c0_28, %c0_29], %49 {strides = array<i32>} : memref<8x2x196xf32, #tpu.memory_space<vmem>>, vector<8x2x196xf32>,
    return
  }
  func.func @transform_0(%arg0: i32) -> (i32, i32, i32) {
    %c0_i32 = arith.constant 0 : i32
    %c0_i32_0 = arith.constant 0 : i32
    %c0_i32_1 = arith.constant 0 : i32
    return %arg0, %c0_i32, %c0_i32_0 : i32, i32, i32
  }
  func.func @transform_1(%arg0: i32) -> (i32, i32) {
    %c0_i32 = arith.constant 0 : i32
    %c0_i32_0 = arith.constant 0 : i32
    %c0_i32_1 = arith.constant 0 : i32
    return %c0_i32, %c0_i32_0 : i32, i32
  }
  func.func @transform_2(%arg0: i32) -> (i32, i32) {
    %c0_i32 = arith.constant 0 : i32
    %c0_i32_0 = arith.constant 0 : i32
    %c0_i32_1 = arith.constant 0 : i32
    return %c0_i32, %c0_i32_0 : i32, i32
  }
  func.func @transform_3(%arg0: i32) -> (i32, i32) {
    %c0_i32 = arith.constant 0 : i32
    %c0_i32_0 = arith.constant 0 : i32
    %c0_i32_1 = arith.constant 0 : i32
    return %c0_i32, %c0_i32_0 : i32, i32
  }
  func.func @transform_4(%arg0: i32) -> (i32, i32) {
    %c0_i32 = arith.constant 0 : i32
    %c0_i32_0 = arith.constant 0 : i32
    %c0_i32_1 = arith.constant 0 : i32
    return %c0_i32, %c0_i32_0 : i32, i32
  }
  func.func @transform_5(%arg0: i32) -> (i32, i32) {
    %c0_i32 = arith.constant 0 : i32
    %c0_i32_0 = arith.constant 0 : i32
    %c0_i32_1 = arith.constant 0 : i32
    return %c0_i32, %c0_i32_0 : i32, i32
  }
  func.func @transform_6(%arg0: i32) -> (i32, i32) {
    %c0_i32 = arith.constant 0 : i32
    %c0_i32_0 = arith.constant 0 : i32
    %c0_i32_1 = arith.constant 0 : i32
    return %c0_i32, %c0_i32_0 : i32, i32
  }
  func.func @transform_7(%arg0: i32) -> i32 {
    %c0_i32 = arith.constant 0 : i32
    %c0_i32_0 = arith.constant 0 : i32
    return %c0_i32 : i32
  }
  func.func @transform_8(%arg0: i32) -> (i32, i32, i32) {
    %c0_i32 = arith.constant 0 : i32
    %c0_i32_0 = arith.constant 0 : i32
    %c0_i32_1 = arith.constant 0 : i32
    return %arg0, %c0_i32, %c0_i32_0 : i32, i32, i32
  }
}

</mosaic_0001>

<llo_original>
// kernel: tpu_custom_call.1
$region0: #{tpu_custom_call.1}
  #allocation0 [shape = 'u32[]', space=smem, size = 0x4, offset = 0x4, fixed_abs, tag = 'smem constant byte address 0x4 - core index']
  #allocation1 [shape = 'u32[72,128]{1,0:T(1,128)}', space=vmem, size = 0x9000, scoped, tag = 'internal scratch']
  %s0 = inlined_call_operand.vmem [shape: f32[16,2,196], index: 0, kind: input, shape index: {}]
  %s1 = inlined_call_operand.vmem [shape: f32[196,49], index: 1, kind: input, shape index: {}]
  %s2 = inlined_call_operand.hbm [shape: f32[196,196], index: 2, kind: input, shape index: {}]
  %s3 = inlined_call_operand.vmem [shape: f32[49,196], index: 3, kind: input, shape index: {}]
  %s4 = inlined_call_operand.vmem [shape: f32[2,8], index: 4, kind: input, shape index: {}]
  %s5 = inlined_call_operand.vmem [shape: f32[8,2], index: 5, kind: input, shape index: {}]
  %s6 = inlined_call_operand.vmem [shape: f32[8,1], index: 6, kind: input, shape index: {}]
  %s7 = inlined_call_operand.vmem [shape: f32[3], index: 7, kind: input, shape index: {}]
  %s8 = inlined_call_operand.hbm [shape: f32[16,2,196], index: 8, kind: output, shape index: {}]
  %s9 = sld [smem:[#allocation0]]
  $region73: #{tpu_custom_call.1} parent=0
    _
  %s11 = ssub.s32 1, %s9
  %s12 = scalar_select 0, %s11, %s9
  $region1: #{tpu_custom_call.1} parent=0
    #allocation2 [shape = 'u8[204800]{0}', space=vmem, size = 0x32000, scoped, tag = 'input window, operand 2, single buffered']
    #allocation3 [shape = 's32[2]{0}', space=sflag, size = 0x8, scoped, tag = 'scoped memory for tpu_custom_call.1']
    #allocation4 [shape = 's32[2]{0}', space=sflag, size = 0x8, scoped, tag = 'scoped memory for tpu_custom_call.1']
    #allocation5 [shape = 's32[2]{0}', space=sflag, size = 0x8, scoped, tag = 'scoped memory for tpu_custom_call.1']
    #allocation6 [shape = 'u8[512]{0}', space=smem, size = 0x200, scoped, tag = 'input window, operand 7, single buffered']
    #allocation7 [shape = 'u8[32768]{0}', space=vmem, size = 0x8000, scoped, tag = 'output window, operand 0']
    %13 = vsyncpa [#allocation3], 0
    %14 = vsyncpa [#allocation5], 0
    %15 = vsyncpa [#allocation4], 0
    %s16 = scalar_lea.sflag [#allocation4], 1
    %17 = vsyncpa %s16, 0
    loop: start=0, step=1, limit=4
    $region2: #{tpu_custom_call.1} parent=1 // loop_pre_header
      _
    $region3: #{tpu_custom_call.1} parent=1 // loop_header
      %s19 = sphi 0, %s23
      %p20 = scmp.ge.s32.totalorder %s19, 4
      %s29 = sphi 0, %s31
      %s32 = sphi 0, %s29
      %s33 = sphi 0, %s32
      %s49 = sphi 0, %s33
      %s53 = sphi 0, %s53
      %s55 = sphi 0, %s53
      %s56 = sphi 0, %s55
      %s70 = sphi 0, %s56
      %s74 = sphi 0, %s74
      %s76 = sphi 0, %s74
      %s77 = sphi 0, %s76
      %s91 = sphi 0, %s77
      %s95 = sphi 0, %s95
      %s97 = sphi 0, %s95
      %s98 = sphi 0, %s97
      %s112 = sphi 0, %s98
      %s116 = sphi 0, %s116
      %s118 = sphi 0, %s116
      %s119 = sphi 0, %s118
      %s133 = sphi 0, %s119
      %s137 = sphi 0, %s137
      %s139 = sphi 0, %s137
      %s140 = sphi 0, %s139
      %s154 = sphi 0, %s140
      %s158 = sphi 0, %s158
      %s160 = sphi 0, %s158
      %s161 = sphi 0, %s160
      %s175 = sphi 0, %s161
      %s179 = sphi 0, %s179
      %s181 = sphi 0, %s179
      %s182 = sphi 0, %s181
      %s196 = sphi 0, %s182
      %s202 = sphi 0, %s204
      %s205 = sphi 0, %s202
      %s206 = sphi 0, %s205
      %s222 = sphi 0, %s206
    $region4: #{tpu_custom_call.1} parent=1 // loop_header_branch
      %22 = sbr.rel (%p20) target = $region8
    $region5: #{tpu_custom_call.1} parent=1 // loop_body
      %s24 = ssub.s32 %s19, 1
      %s25 = ssub.s32 %s19, 2
      %s26 = sadd.s32 %s19, 1
      %s27 = ssub.s32 %s19, %s26
      %p28 = scmp.eq.s32.totalorder %s27, 0
      %s30 = sadd.s32 %s29, 1
      %s31 = scalar_select %p28, %s29, %s30
      %p34 = pneg %p28
      %p35 = scmp.eq.s32.totalorder %s19, 1
      %p36 = por %p34, %p35
      %p37 = scmp.ne.s32.totalorder %s29, %s32
      %p38 = scmp.eq.s32.totalorder %s19, 0
      %p39 = por %p37, %p38
      %p40 = scmp.ne.s32.totalorder %s29, %s32
      %p41 = scmp.eq.s32.totalorder %s24, 1
      %p42 = por %p40, %p41
      %p43 = scmp.ne.s32.totalorder %s32, %s33
      %p44 = scmp.eq.s32.totalorder %s24, 0
      %p45 = por %p43, %p44
      %p46 = scmp.ne.s32.totalorder %s32, %s33
      %p47 = scmp.eq.s32.totalorder %s25, 1
      %p48 = por %p46, %p47
      %p50 = scmp.ne.s32.totalorder %s33, %s49
      %p51 = scmp.eq.s32.totalorder %s25, 0
      %p52 = por %p50, %p51
      %s54 = sadd.s32 %s53, 1
      %p57 = scmp.eq.s32.totalorder %s19, 1
      %p58 = scmp.ne.s32.totalorder %s53, %s55
      %p59 = scmp.eq.s32.totalorder %s19, 0
      %p60 = por %p58, %p59
      %p61 = scmp.ne.s32.totalorder %s53, %s55
      %p62 = scmp.eq.s32.totalorder %s24, 1
      %p63 = por %p61, %p62
      %p64 = scmp.ne.s32.totalorder %s55, %s56
      %p65 = scmp.eq.s32.totalorder %s24, 0
      %p66 = por %p64, %p65
      %p67 = scmp.ne.s32.totalorder %s55, %s56
      %p68 = scmp.eq.s32.totalorder %s25, 1
      %p69 = por %p67, %p68
      %p71 = scmp.ne.s32.totalorder %s56, %s70
      %p72 = scmp.eq.s32.totalorder %s25, 0
      %p73 = por %p71, %p72
      %s75 = sadd.s32 %s74, 1
      %p78 = scmp.eq.s32.totalorder %s19, 1
      %p79 = scmp.ne.s32.totalorder %s74, %s76
      %p80 = scmp.eq.s32.totalorder %s19, 0
      %p81 = por %p79, %p80
      %p82 = scmp.ne.s32.totalorder %s74, %s76
      %p83 = scmp.eq.s32.totalorder %s24, 1
      %p84 = por %p82, %p83
      %p85 = scmp.ne.s32.totalorder %s76, %s77
      %p86 = scmp.eq.s32.totalorder %s24, 0
      %p87 = por %p85, %p86
      %p88 = scmp.ne.s32.totalorder %s76, %s77
      %p89 = scmp.eq.s32.totalorder %s25, 1
      %p90 = por %p88, %p89
      %p92 = scmp.ne.s32.totalorder %s77, %s91
      %p93 = scmp.eq.s32.totalorder %s25, 0
      %p94 = por %p92, %p93
      %s96 = sadd.s32 %s95, 1
      %p99 = scmp.eq.s32.totalorder %s19, 1
      %p100 = scmp.ne.s32.totalorder %s95, %s97
      %p101 = scmp.eq.s32.totalorder %s19, 0
      %p102 = por %p100, %p101
      %p103 = scmp.ne.s32.totalorder %s95, %s97
      %p104 = scmp.eq.s32.totalorder %s24, 1
      %p105 = por %p103, %p104
      %p106 = scmp.ne.s32.totalorder %s97, %s98
      %p107 = scmp.eq.s32.totalorder %s24, 0
      %p108 = por %p106, %p107
      %p109 = scmp.ne.s32.totalorder %s97, %s98
      %p110 = scmp.eq.s32.totalorder %s25, 1
      %p111 = por %p109, %p110
      %p113 = scmp.ne.s32.totalorder %s98, %s112
      %p114 = scmp.eq.s32.totalorder %s25, 0
      %p115 = por %p113, %p114
      %s117 = sadd.s32 %s116, 1
      %p120 = scmp.eq.s32.totalorder %s19, 1
      %p121 = scmp.ne.s32.totalorder %s116, %s118
      %p122 = scmp.eq.s32.totalorder %s19, 0
      %p123 = por %p121, %p122
      %p124 = scmp.ne.s32.totalorder %s116, %s118
      %p125 = scmp.eq.s32.totalorder %s24, 1
      %p126 = por %p124, %p125
      %p127 = scmp.ne.s32.totalorder %s118, %s119
      %p128 = scmp.eq.s32.totalorder %s24, 0
      %p129 = por %p127, %p128
      %p130 = scmp.ne.s32.totalorder %s118, %s119
      %p131 = scmp.eq.s32.totalorder %s25, 1
      %p132 = por %p130, %p131
      %p134 = scmp.ne.s32.totalorder %s119, %s133
      %p135 = scmp.eq.s32.totalorder %s25, 0
      %p136 = por %p134, %p135
      %s138 = sadd.s32 %s137, 1
      %p141 = scmp.eq.s32.totalorder %s19, 1
      %p142 = scmp.ne.s32.totalorder %s137, %s139
      %p143 = scmp.eq.s32.totalorder %s19, 0
      %p144 = por %p142, %p143
      %p145 = scmp.ne.s32.totalorder %s137, %s139
      %p146 = scmp.eq.s32.totalorder %s24, 1
      %p147 = por %p145, %p146
      %p148 = scmp.ne.s32.totalorder %s139, %s140
      %p149 = scmp.eq.s32.totalorder %s24, 0
      %p150 = por %p148, %p149
      %p151 = scmp.ne.s32.totalorder %s139, %s140
      %p152 = scmp.eq.s32.totalorder %s25, 1
      %p153 = por %p151, %p152
      %p155 = scmp.ne.s32.totalorder %s140, %s154
      %p156 = scmp.eq.s32.totalorder %s25, 0
      %p157 = por %p155, %p156
      %s159 = sadd.s32 %s158, 1
      %p162 = scmp.eq.s32.totalorder %s19, 1
      %p163 = scmp.ne.s32.totalorder %s158, %s160
      %p164 = scmp.eq.s32.totalorder %s19, 0
      %p165 = por %p163, %p164
      %p166 = scmp.ne.s32.totalorder %s158, %s160
      %p167 = scmp.eq.s32.totalorder %s24, 1
      %p168 = por %p166, %p167
      %p169 = scmp.ne.s32.totalorder %s160, %s161
      %p170 = scmp.eq.s32.totalorder %s24, 0
      %p171 = por %p169, %p170
      %p172 = scmp.ne.s32.totalorder %s160, %s161
      %p173 = scmp.eq.s32.totalorder %s25, 1
      %p174 = por %p172, %p173
      %p176 = scmp.ne.s32.totalorder %s161, %s175
      %p177 = scmp.eq.s32.totalorder %s25, 0
      %p178 = por %p176, %p177
      %s180 = sadd.s32 %s179, 1
      %p183 = scmp.eq.s32.totalorder %s19, 1
      %p184 = scmp.ne.s32.totalorder %s179, %s181
      %p185 = scmp.eq.s32.totalorder %s19, 0
      %p186 = por %p184, %p185
      %p187 = scmp.ne.s32.totalorder %s179, %s181
      %p188 = scmp.eq.s32.totalorder %s24, 1
      %p189 = por %p187, %p188
      %p190 = scmp.ne.s32.totalorder %s181, %s182
      %p191 = scmp.eq.s32.totalorder %s24, 0
      %p192 = por %p190, %p191
      %p193 = scmp.ne.s32.totalorder %s181, %s182
      %p194 = scmp.eq.s32.totalorder %s25, 1
      %p195 = por %p193, %p194
      %p197 = scmp.ne.s32.totalorder %s182, %s196
      %p198 = scmp.eq.s32.totalorder %s25, 0
      %p199 = por %p197, %p198
      %s200 = ssub.s32 %s19, %s26
      %p201 = scmp.eq.s32.totalorder %s200, 0
      %s203 = sadd.s32 %s202, 1
      %s204 = scalar_select %p201, %s202, %s203
      %p207 = pneg %p201
      %p208 = scmp.eq.s32.totalorder %s19, 1
      %p209 = por %p207, %p208
      %p210 = scmp.ne.s32.totalorder %s202, %s205
      %p211 = scmp.eq.s32.totalorder %s19, 0
      %p212 = por %p210, %p211
      %p213 = scmp.ne.s32.totalorder %s202, %s205
      %p214 = scmp.eq.s32.totalorder %s24, 1
      %p215 = por %p213, %p214
      %p216 = scmp.ne.s32.totalorder %s205, %s206
      %p217 = scmp.eq.s32.totalorder %s24, 0
      %p218 = por %p216, %p217
      %p219 = scmp.ne.s32.totalorder %s205, %s206
      %p220 = scmp.eq.s32.totalorder %s25, 1
      %p221 = por %p219, %p220
      %p223 = scmp.ne.s32.totalorder %s206, %s222
      %p224 = scmp.eq.s32.totalorder %s25, 0
      %p225 = por %p223, %p224
      %p226 = scmp.le.s32.totalorder 1, %s19
      %p227 = scmp.lt.s32.totalorder %s19, 3
      %p228 = pnand %p226, %p227
      %p229 = pneg %p228
      // Predicated region
      $region9: #{tpu_custom_call.1} parent=5 // pred_check
        _
      $region10: #{tpu_custom_call.1} parent=5 // pred_check_branch
        %231 = sbr.rel (%p228) target = $region12
      $region11: #{tpu_custom_call.1} parent=5 // pred_region
        %s232 = ssub.s32 %s19, 1
        // Predicated region
        $region13: #{tpu_custom_call.1} parent=11 // pred_check
          %p233 = pneg %p66
        $region14: #{tpu_custom_call.1} parent=11 // pred_check_branch
          %235 = sbr.rel (%p233) target = $region16
        $region15: #{tpu_custom_call.1} parent=11 // pred_region
          _
        $region16: #{tpu_custom_call.1} parent=11 // pred_fallthru
          _
        // Predicated region
        $region17: #{tpu_custom_call.1} parent=11 // pred_check
          %p236 = pneg %p87
        $region18: #{tpu_custom_call.1} parent=11 // pred_check_branch
          %238 = sbr.rel (%p236) target = $region20
        $region19: #{tpu_custom_call.1} parent=11 // pred_region
          %240 = vsyncadd [#allocation3], 0
          %s241 = sshll.u32 %s2, 4
          %s242 = int_to_ptr.hbm [resolvable:$true] %s241
          %s243 = sshll.u32 [#allocation2], 4
          %s244 = int_to_ptr.vmem [resolvable:$true] %s243
          %249 = dma.hbm_to_vmem [thread:$0]  %s242, 6400, %s244, [#allocation3], 256, 256, 16
        $region20: #{tpu_custom_call.1} parent=11 // pred_fallthru
          _
        // Predicated region
        $region21: #{tpu_custom_call.1} parent=11 // pred_check
          %p250 = pneg %p108
        $region22: #{tpu_custom_call.1} parent=11 // pred_check_branch
          %252 = sbr.rel (%p250) target = $region24
        $region23: #{tpu_custom_call.1} parent=11 // pred_region
          _
        $region24: #{tpu_custom_call.1} parent=11 // pred_fallthru
          _
        // Predicated region
        $region25: #{tpu_custom_call.1} parent=11 // pred_check
          %p253 = pneg %p129
        $region26: #{tpu_custom_call.1} parent=11 // pred_check_branch
          %255 = sbr.rel (%p253) target = $region28
        $region27: #{tpu_custom_call.1} parent=11 // pred_region
          _
        $region28: #{tpu_custom_call.1} parent=11 // pred_fallthru
          _
        // Predicated region
        $region29: #{tpu_custom_call.1} parent=11 // pred_check
          %p256 = pneg %p150
        $region30: #{tpu_custom_call.1} parent=11 // pred_check_branch
          %258 = sbr.rel (%p256) target = $region32
        $region31: #{tpu_custom_call.1} parent=11 // pred_region
          _
        $region32: #{tpu_custom_call.1} parent=11 // pred_fallthru
          _
        // Predicated region
        $region33: #{tpu_custom_call.1} parent=11 // pred_check
          %p259 = pneg %p171
        $region34: #{tpu_custom_call.1} parent=11 // pred_check_branch
          %261 = sbr.rel (%p259) target = $region36
        $region35: #{tpu_custom_call.1} parent=11 // pred_region
          _
        $region36: #{tpu_custom_call.1} parent=11 // pred_fallthru
          _
        // Predicated region
        $region37: #{tpu_custom_call.1} parent=11 // pred_check
          %p262 = pneg %p192
        $region38: #{tpu_custom_call.1} parent=11 // pred_check_branch
          %264 = sbr.rel (%p262) target = $region40
        $region39: #{tpu_custom_call.1} parent=11 // pred_region
          %266 = vsyncadd [#allocation5], 0
          %s268 = sshll.u32 %s7, 4
          %s269 = int_to_ptr.vmem [resolvable:$true] %s268
          %271 = dma.vmem_to_smem %s269, 16, [#allocation6], [#allocation5]
        $region40: #{tpu_custom_call.1} parent=11 // pred_fallthru
          _
      $region12: #{tpu_custom_call.1} parent=5 // pred_fallthru
        _
      %p272 = scmp.lt.s32.totalorder %s19, 2
      // Predicated region
      $region41: #{tpu_custom_call.1} parent=5 // pred_check
        %p273 = pneg %p272
      $region42: #{tpu_custom_call.1} parent=5 // pred_check_branch
        %275 = sbr.rel (%p273) target = $region44
      $region43: #{tpu_custom_call.1} parent=5 // pred_region
        // Predicated region
        $region45: #{tpu_custom_call.1} parent=43 // pred_check
          %p276 = pneg %p39
        $region46: #{tpu_custom_call.1} parent=43 // pred_check_branch
          %278 = sbr.rel (%p276) target = $region48
        $region47: #{tpu_custom_call.1} parent=43 // pred_region
          %s279 = smul.u32 8, %s19
          %p280 = scmp.lt.s32.totalorder %s279, 15
          %s281 = scalar_select %p280, %s279, 15
          %s282 = smul.addr %s281, 2
          %s283 = smul.addr %s282, 2
          %s284 = scalar_lea.vmem %s0, %s283
          %s285 = smul.u32 8, %s19
        $region48: #{tpu_custom_call.1} parent=43 // pred_fallthru
          _
      $region44: #{tpu_custom_call.1} parent=5 // pred_fallthru
        _
      %p286 = scmp.le.s32.totalorder 1, %s19
      %p287 = scmp.lt.s32.totalorder %s19, 3
      %p288 = pnand %p286, %p287
      %p289 = pneg %p288
      // Predicated region
      $region49: #{tpu_custom_call.1} parent=5 // pred_check
        _
      $region50: #{tpu_custom_call.1} parent=5 // pred_check_branch
        %291 = sbr.rel (%p288) target = $region52
      $region51: #{tpu_custom_call.1} parent=5 // pred_region
        %s292 = ssub.s32 %s19, 1
        // Predicated region
        $region53: #{tpu_custom_call.1} parent=51 // pred_check
          %p293 = pneg %p87
        $region54: #{tpu_custom_call.1} parent=51 // pred_check_branch
          %295 = sbr.rel (%p293) target = $region56
        $region55: #{tpu_custom_call.1} parent=51 // pred_region
          %297 = dma.done [#allocation3], 6400
        $region56: #{tpu_custom_call.1} parent=51 // pred_fallthru
          _
        // Predicated region
        $region57: #{tpu_custom_call.1} parent=51 // pred_check
          %p298 = pneg %p192
        $region58: #{tpu_custom_call.1} parent=51 // pred_check_branch
          %300 = sbr.rel (%p298) target = $region60
        $region59: #{tpu_custom_call.1} parent=51 // pred_region
          %302 = dma.done [#allocation5], 16
        $region60: #{tpu_custom_call.1} parent=51 // pred_fallthru
          _
        %303 = sfence
        %s304 = smul.u32 8, %s24
        %p305 = scmp.lt.s32.totalorder %s304, 15
        %s306 = scalar_select %p305, %s304, 15
        %s307 = smul.addr %s306, 2
        %s308 = smul.addr %s307, 2
        %s309 = scalar_lea.vmem %s0, %s308
        %p310 = pneg %p45
        %p311 = pneg %p42
        %p312 = pneg %p66
        %p313 = pneg %p63
        %p314 = pneg %p87
        %p315 = pneg %p84
        %p316 = pneg %p108
        %p317 = pneg %p105
        %p318 = pneg %p129
        %p319 = pneg %p126
        %p320 = pneg %p150
        %p321 = pneg %p147
        %p322 = pneg %p171
        %p323 = pneg %p168
        %p324 = pneg %p192
        %p325 = pneg %p189
        %p326 = pneg %p218
        %p327 = pneg %p215
        %s328 = sand.u32 %s205, 1
        %s329 = scalar_lea.sflag [#allocation4], %s328
        %s330 = sand.u32 %s205, 1
        %s331 = smul.addr %s330, 32
        %s332 = scalar_lea.vmem [#allocation7], %s331
        %s333 = smul.u32 8, %s24
        %p334 = scmp.lt.s32.totalorder %s333, 15
        %s335 = scalar_select %p334, %s333, 15
        %s336 = smul.addr %s335, 2
        %s337 = smul.addr %s336, 2
        %s338 = scalar_lea.vmem %s0, %s337
        %s339 = smul.u32 8, %s24
        %s340 = smul.u32 8, %s24
        %s341 = sld [smem:[#allocation6]]
        %s342 = sld [smem:[#allocation6 + $0x1]]
        %s343 = sld [smem:[#allocation6 + $0x2]]
        %v344 = vld [vmem:[%s338] sm:$0xf]
        %v345 = vld [vmem:[%s338 + $0x4] sm:$0xf]
        %v346 = vld [vmem:[%s338 + $0x8] sm:$0xf]
        %v347 = vld [vmem:[%s338 + $0xc] sm:$0xf]
        %v348 = vld [vmem:[%s338 + $0x10] sm:$0xf]
        %v349 = vld [vmem:[%s338 + $0x14] sm:$0xf]
        %v350 = vld [vmem:[%s338 + $0x18] sm:$0xf]
        %v351 = vld [vmem:[%s338 + $0x1c] sm:$0xf]
        %360 = vst [vmem:[#allocation1] ss:$4 sm:$0xff] %v344
        %v361 = vld.sshfl [vmem:[#allocation1] sm:$0xff pattern:$0x73625140]
        %v362 = vld.sshfl [vmem:[#allocation1 + $0x8] sm:$0xff pattern:$0x73625140]
        %s363 = scalar_lea.vmem [#allocation1], 32
        %364 = vst [vmem:[%s363] ss:$4 sm:$0xff] %v345
        %v365 = vld.sshfl [vmem:[#allocation1 + $0x20] sm:$0xff pattern:$0x73625140]
        %v366 = vld.sshfl [vmem:[#allocation1 + $0x28] sm:$0xff pattern:$0x73625140]
        %367 = vst [vmem:[#allocation1] ss:$4 sm:$0xff] %v346
        %v368 = vld.sshfl [vmem:[#allocation1] sm:$0xff pattern:$0x73625140]
        %v369 = vld.sshfl [vmem:[#allocation1 + $0x8] sm:$0xff pattern:$0x73625140]
        %370 = vst [vmem:[%s363] ss:$4 sm:$0xff] %v347
        %v371 = vld.sshfl [vmem:[#allocation1 + $0x20] sm:$0xff pattern:$0x73625140]
        %v372 = vld.sshfl [vmem:[#allocation1 + $0x28] sm:$0xff pattern:$0x73625140]
        %373 = vst [vmem:[#allocation1] ss:$4 sm:$0xff] %v348
        %v374 = vld.sshfl [vmem:[#allocation1] sm:$0xff pattern:$0x73625140]
        %v375 = vld.sshfl [vmem:[#allocation1 + $0x8] sm:$0xff pattern:$0x73625140]
        %376 = vst [vmem:[%s363] ss:$4 sm:$0xff] %v349
        %v377 = vld.sshfl [vmem:[#allocation1 + $0x20] sm:$0xff pattern:$0x73625140]
        %v378 = vld.sshfl [vmem:[#allocation1 + $0x28] sm:$0xff pattern:$0x73625140]
        %379 = vst [vmem:[#allocation1] ss:$4 sm:$0xff] %v350
        %v380 = vld.sshfl [vmem:[#allocation1] sm:$0xff pattern:$0x73625140]
        %v381 = vld.sshfl [vmem:[#allocation1 + $0x8] sm:$0xff pattern:$0x73625140]
        %382 = vst [vmem:[%s363] ss:$4 sm:$0xff] %v351
        %v383 = vld.sshfl [vmem:[#allocation1 + $0x20] sm:$0xff pattern:$0x73625140]
        %v384 = vld.sshfl [vmem:[#allocation1 + $0x28] sm:$0xff pattern:$0x73625140]
        %vm401 = vcmask 1041408
        %v402 = vsel %vm401, %v361, 0.0
        %v403 = vrot.slane %v402, 4
        %v404 = vadd.f32 %v402, %v403
        %v405 = vrot.slane %v404, 2
        %v406 = vadd.f32 %v404, %v405
        %v407 = vrot.slane %v406, 1
        %v408 = vadd.f32 %v406, %v407
        %vm409 = vcmask 549888
        %v410 = vsel %vm409, %v362, 0.0
        %v411 = vrot.slane %v410, 4
        %v412 = vadd.f32 %v410, %v411
        %v413 = vrot.slane %v412, 2
        %v414 = vadd.f32 %v412, %v413
        %v415 = vrot.slane %v414, 1
        %v416 = vadd.f32 %v414, %v415
        %v417 = vsel %vm401, %v365, 0.0
        %v418 = vrot.slane %v417, 4
        %v419 = vadd.f32 %v417, %v418
        %v420 = vrot.slane %v419, 2
        %v421 = vadd.f32 %v419, %v420
        %v422 = vrot.slane %v421, 1
        %v423 = vadd.f32 %v421, %v422
        %v424 = vsel %vm409, %v366, 0.0
        %v425 = vrot.slane %v424, 4
        %v426 = vadd.f32 %v424, %v425
        %v427 = vrot.slane %v426, 2
        %v428 = vadd.f32 %v426, %v427
        %v429 = vrot.slane %v428, 1
        %v430 = vadd.f32 %v428, %v429
        %v431 = vsel %vm401, %v368, 0.0
        %v432 = vrot.slane %v431, 4
        %v433 = vadd.f32 %v431, %v432
        %v434 = vrot.slane %v433, 2
        %v435 = vadd.f32 %v433, %v434
        %v436 = vrot.slane %v435, 1
        %v437 = vadd.f32 %v435, %v436
        %v438 = vsel %vm409, %v369, 0.0
        %v439 = vrot.slane %v438, 4
        %v440 = vadd.f32 %v438, %v439
        %v441 = vrot.slane %v440, 2
        %v442 = vadd.f32 %v440, %v441
        %v443 = vrot.slane %v442, 1
        %v444 = vadd.f32 %v442, %v443
        %v445 = vsel %vm401, %v371, 0.0
        %v446 = vrot.slane %v445, 4
        %v447 = vadd.f32 %v445, %v446
        %v448 = vrot.slane %v447, 2
        %v449 = vadd.f32 %v447, %v448
        %v450 = vrot.slane %v449, 1
        %v451 = vadd.f32 %v449, %v450
        %v452 = vsel %vm409, %v372, 0.0
        %v453 = vrot.slane %v452, 4
        %v454 = vadd.f32 %v452, %v453
        %v455 = vrot.slane %v454, 2
        %v456 = vadd.f32 %v454, %v455
        %v457 = vrot.slane %v456, 1
        %v458 = vadd.f32 %v456, %v457
        %v459 = vsel %vm401, %v374, 0.0
        %v460 = vrot.slane %v459, 4
        %v461 = vadd.f32 %v459, %v460
        %v462 = vrot.slane %v461, 2
        %v463 = vadd.f32 %v461, %v462
        %v464 = vrot.slane %v463, 1
        %v465 = vadd.f32 %v463, %v464
        %v466 = vsel %vm409, %v375, 0.0
        %v467 = vrot.slane %v466, 4
        %v468 = vadd.f32 %v466, %v467
        %v469 = vrot.slane %v468, 2
        %v470 = vadd.f32 %v468, %v469
        %v471 = vrot.slane %v470, 1
        %v472 = vadd.f32 %v470, %v471
        %v473 = vsel %vm401, %v377, 0.0
        %v474 = vrot.slane %v473, 4
        %v475 = vadd.f32 %v473, %v474
        %v476 = vrot.slane %v475, 2
        %v477 = vadd.f32 %v475, %v476
        %v478 = vrot.slane %v477, 1
        %v479 = vadd.f32 %v477, %v478
        %v480 = vsel %vm409, %v378, 0.0
        %v481 = vrot.slane %v480, 4
        %v482 = vadd.f32 %v480, %v481
        %v483 = vrot.slane %v482, 2
        %v484 = vadd.f32 %v482, %v483
        %v485 = vrot.slane %v484, 1
        %v486 = vadd.f32 %v484, %v485
        %v487 = vsel %vm401, %v380, 0.0
        %v488 = vrot.slane %v487, 4
        %v489 = vadd.f32 %v487, %v488
        %v490 = vrot.slane %v489, 2
        %v491 = vadd.f32 %v489, %v490
        %v492 = vrot.slane %v491, 1
        %v493 = vadd.f32 %v491, %v492
        %v494 = vsel %vm409, %v381, 0.0
        %v495 = vrot.slane %v494, 4
        %v496 = vadd.f32 %v494, %v495
        %v497 = vrot.slane %v496, 2
        %v498 = vadd.f32 %v496, %v497
        %v499 = vrot.slane %v498, 1
        %v500 = vadd.f32 %v498, %v499
        %v501 = vsel %vm401, %v383, 0.0
        %v502 = vrot.slane %v501, 4
        %v503 = vadd.f32 %v501, %v502
        %v504 = vrot.slane %v503, 2
        %v505 = vadd.f32 %v503, %v504
        %v506 = vrot.slane %v505, 1
        %v507 = vadd.f32 %v505, %v506
        %v508 = vsel %vm409, %v384, 0.0
        %v509 = vrot.slane %v508, 4
        %v510 = vadd.f32 %v508, %v509
        %v511 = vrot.slane %v510, 2
        %v512 = vadd.f32 %v510, %v511
        %v513 = vrot.slane %v512, 1
        %v514 = vadd.f32 %v512, %v513
        %515 = vst [vmem:[#allocation1] ss:$4 sm:$0xff] %v344
        %v516 = vld.sshfl [vmem:[#allocation1] sm:$0xff pattern:$0x73625140]
        %v517 = vld.sshfl [vmem:[#allocation1 + $0x8] sm:$0xff pattern:$0x73625140]
        %s518 = scalar_lea.vmem [#allocation1], 32
        %519 = vst [vmem:[%s518] ss:$4 sm:$0xff] %v345
        %v520 = vld.sshfl [vmem:[#allocation1 + $0x20] sm:$0xff pattern:$0x73625140]
        %v521 = vld.sshfl [vmem:[#allocation1 + $0x28] sm:$0xff pattern:$0x73625140]
        %522 = vst [vmem:[#allocation1] ss:$4 sm:$0xff] %v346
        %v523 = vld.sshfl [vmem:[#allocation1] sm:$0xff pattern:$0x73625140]
        %v524 = vld.sshfl [vmem:[#allocation1 + $0x8] sm:$0xff pattern:$0x73625140]
        %525 = vst [vmem:[%s518] ss:$4 sm:$0xff] %v347
        %v526 = vld.sshfl [vmem:[#allocation1 + $0x20] sm:$0xff pattern:$0x73625140]
        %v527 = vld.sshfl [vmem:[#allocation1 + $0x28] sm:$0xff pattern:$0x73625140]
        %528 = vst [vmem:[#allocation1] ss:$4 sm:$0xff] %v348
        %v529 = vld.sshfl [vmem:[#allocation1] sm:$0xff pattern:$0x73625140]
        %v530 = vld.sshfl [vmem:[#allocation1 + $0x8] sm:$0xff pattern:$0x73625140]
        %531 = vst [vmem:[%s518] ss:$4 sm:$0xff] %v349
        %v532 = vld.sshfl [vmem:[#allocation1 + $0x20] sm:$0xff pattern:$0x73625140]
        %v533 = vld.sshfl [vmem:[#allocation1 + $0x28] sm:$0xff pattern:$0x73625140]
        %534 = vst [vmem:[#allocation1] ss:$4 sm:$0xff] %v350
        %v535 = vld.sshfl [vmem:[#allocation1] sm:$0xff pattern:$0x73625140]
        %v536 = vld.sshfl [vmem:[#allocation1 + $0x8] sm:$0xff pattern:$0x73625140]
        %537 = vst [vmem:[%s518] ss:$4 sm:$0xff] %v351
        %v538 = vld.sshfl [vmem:[#allocation1 + $0x20] sm:$0xff pattern:$0x73625140]
        %v539 = vld.sshfl [vmem:[#allocation1 + $0x28] sm:$0xff pattern:$0x73625140]
        %v556 = vsel %vm401, %v516, -inf
        %v557 = vrot.slane %v556, 4
        %v558 = vmax.f32 %v556, %v557
        %v559 = vrot.slane %v558, 2
        %v560 = vmax.f32 %v558, %v559
        %v561 = vrot.slane %v560, 1
        %v562 = vmax.f32 %v560, %v561
        %v563 = vsel %vm409, %v517, -inf
        %v564 = vrot.slane %v563, 4
        %v565 = vmax.f32 %v563, %v564
        %v566 = vrot.slane %v565, 2
        %v567 = vmax.f32 %v565, %v566
        %v568 = vrot.slane %v567, 1
        %v569 = vmax.f32 %v567, %v568
        %v570 = vsel %vm401, %v520, -inf
        %v571 = vrot.slane %v570, 4
        %v572 = vmax.f32 %v570, %v571
        %v573 = vrot.slane %v572, 2
        %v574 = vmax.f32 %v572, %v573
        %v575 = vrot.slane %v574, 1
        %v576 = vmax.f32 %v574, %v575
        %v577 = vsel %vm409, %v521, -inf
        %v578 = vrot.slane %v577, 4
        %v579 = vmax.f32 %v577, %v578
        %v580 = vrot.slane %v579, 2
        %v581 = vmax.f32 %v579, %v580
        %v582 = vrot.slane %v581, 1
        %v583 = vmax.f32 %v581, %v582
        %v584 = vsel %vm401, %v523, -inf
        %v585 = vrot.slane %v584, 4
        %v586 = vmax.f32 %v584, %v585
        %v587 = vrot.slane %v586, 2
        %v588 = vmax.f32 %v586, %v587
        %v589 = vrot.slane %v588, 1
        %v590 = vmax.f32 %v588, %v589
        %v591 = vsel %vm409, %v524, -inf
        %v592 = vrot.slane %v591, 4
        %v593 = vmax.f32 %v591, %v592
        %v594 = vrot.slane %v593, 2
        %v595 = vmax.f32 %v593, %v594
        %v596 = vrot.slane %v595, 1
        %v597 = vmax.f32 %v595, %v596
        %v598 = vsel %vm401, %v526, -inf
        %v599 = vrot.slane %v598, 4
        %v600 = vmax.f32 %v598, %v599
        %v601 = vrot.slane %v600, 2
        %v602 = vmax.f32 %v600, %v601
        %v603 = vrot.slane %v602, 1
        %v604 = vmax.f32 %v602, %v603
        %v605 = vsel %vm409, %v527, -inf
        %v606 = vrot.slane %v605, 4
        %v607 = vmax.f32 %v605, %v606
        %v608 = vrot.slane %v607, 2
        %v609 = vmax.f32 %v607, %v608
        %v610 = vrot.slane %v609, 1
        %v611 = vmax.f32 %v609, %v610
        %v612 = vsel %vm401, %v529, -inf
        %v613 = vrot.slane %v612, 4
        %v614 = vmax.f32 %v612, %v613
        %v615 = vrot.slane %v614, 2
        %v616 = vmax.f32 %v614, %v615
        %v617 = vrot.slane %v616, 1
        %v618 = vmax.f32 %v616, %v617
        %v619 = vsel %vm409, %v530, -inf
        %v620 = vrot.slane %v619, 4
        %v621 = vmax.f32 %v619, %v620
        %v622 = vrot.slane %v621, 2
        %v623 = vmax.f32 %v621, %v622
        %v624 = vrot.slane %v623, 1
        %v625 = vmax.f32 %v623, %v624
        %v626 = vsel %vm401, %v532, -inf
        %v627 = vrot.slane %v626, 4
        %v628 = vmax.f32 %v626, %v627
        %v629 = vrot.slane %v628, 2
        %v630 = vmax.f32 %v628, %v629
        %v631 = vrot.slane %v630, 1
        %v632 = vmax.f32 %v630, %v631
        %v633 = vsel %vm409, %v533, -inf
        %v634 = vrot.slane %v633, 4
        %v635 = vmax.f32 %v633, %v634
        %v636 = vrot.slane %v635, 2
        %v637 = vmax.f32 %v635, %v636
        %v638 = vrot.slane %v637, 1
        %v639 = vmax.f32 %v637, %v638
        %v640 = vsel %vm401, %v535, -inf
        %v641 = vrot.slane %v640, 4
        %v642 = vmax.f32 %v640, %v641
        %v643 = vrot.slane %v642, 2
        %v644 = vmax.f32 %v642, %v643
        %v645 = vrot.slane %v644, 1
        %v646 = vmax.f32 %v644, %v645
        %v647 = vsel %vm409, %v536, -inf
        %v648 = vrot.slane %v647, 4
        %v649 = vmax.f32 %v647, %v648
        %v650 = vrot.slane %v649, 2
        %v651 = vmax.f32 %v649, %v650
        %v652 = vrot.slane %v651, 1
        %v653 = vmax.f32 %v651, %v652
        %v654 = vsel %vm401, %v538, -inf
        %v655 = vrot.slane %v654, 4
        %v656 = vmax.f32 %v654, %v655
        %v657 = vrot.slane %v656, 2
        %v658 = vmax.f32 %v656, %v657
        %v659 = vrot.slane %v658, 1
        %v660 = vmax.f32 %v658, %v659
        %v661 = vsel %vm409, %v539, -inf
        %v662 = vrot.slane %v661, 4
        %v663 = vmax.f32 %v661, %v662
        %v664 = vrot.slane %v663, 2
        %v665 = vmax.f32 %v663, %v664
        %v666 = vrot.slane %v665, 1
        %v667 = vmax.f32 %v665, %v666
        %v668 = vld [vmem:[%s1] sm:$0xff]
        %v669 = vld [vmem:[%s1 + $0x8] sm:$0xff]
        %v670 = vld [vmem:[%s1 + $0x10] sm:$0xff]
        %v671 = vld [vmem:[%s1 + $0x18] sm:$0xff]
        %v672 = vld [vmem:[%s1 + $0x20] sm:$0xff]
        %v673 = vld [vmem:[%s1 + $0x28] sm:$0xff]
        %v674 = vld [vmem:[%s1 + $0x30] sm:$0xff]
        %v675 = vld [vmem:[%s1 + $0x38] sm:$0xff]
        %v676 = vld [vmem:[%s1 + $0x40] sm:$0xff]
        %v677 = vld [vmem:[%s1 + $0x48] sm:$0xff]
        %v678 = vld [vmem:[%s1 + $0x50] sm:$0xff]
        %v679 = vld [vmem:[%s1 + $0x58] sm:$0xff]
        %v680 = vld [vmem:[%s1 + $0x60] sm:$0xff]
        %v681 = vld [vmem:[%s1 + $0x68] sm:$0xff]
        %v682 = vld [vmem:[%s1 + $0x70] sm:$0xff]
        %v683 = vld [vmem:[%s1 + $0x78] sm:$0xff]
        %v684 = vld [vmem:[%s1 + $0x80] sm:$0xff]
        %v685 = vld [vmem:[%s1 + $0x88] sm:$0xff]
        %v686 = vld [vmem:[%s1 + $0x90] sm:$0xff]
        %v687 = vld [vmem:[%s1 + $0x98] sm:$0xff]
        %v688 = vld [vmem:[%s1 + $0xa0] sm:$0xff]
        %v689 = vld [vmem:[%s1 + $0xa8] sm:$0xff]
        %v690 = vld [vmem:[%s1 + $0xb0] sm:$0xff]
        %v691 = vld [vmem:[%s1 + $0xb8] sm:$0xff]
        %v692 = vld [vmem:[%s1 + $0xc0] sm:$0xf]
        %vm709 = vcmask 1041409
        %v710 = vsel %vm709, %v423, %v408
        %vm711 = vcmask 1042434
        %v712 = vsel %vm711, %v437, %v710
        %vm713 = vcmask 1043459
        %v714 = vsel %vm713, %v451, %v712
        %vm715 = vcmask 1044484
        %v716 = vsel %vm715, %v465, %v714
        %vm717 = vcmask 1045509
        %v718 = vsel %vm717, %v479, %v716
        %vm719 = vcmask 1046534
        %v720 = vsel %vm719, %v493, %v718
        %vm721 = vcmask 1047559
        %v722 = vsel %vm721, %v507, %v720
        %v723 = vsel %vm709, %v430, %v416
        %v724 = vsel %vm711, %v444, %v723
        %v725 = vsel %vm713, %v458, %v724
        %v726 = vsel %vm715, %v472, %v725
        %v727 = vsel %vm717, %v486, %v726
        %v728 = vsel %vm719, %v500, %v727
        %v729 = vsel %vm721, %v514, %v728
        %vm731 = vcmask 556032
        %v732 = vsel %vm731, %v729, 0
        %vm734 = vcmask 1043456
        %v736 = vsel %vm734, %v692, 0
        %738 = vmatpush.msra.mxu0 %v683
        %739 = vmatpush.msra.mxu0 %v682
        %740 = vmatpush.msra.mxu0 %v681
        %741 = vmatpush.msra.mxu0 %v680
        %742 = vmatpush.msra.mxu0 %v679
        %743 = vmatpush.msra.mxu0 %v678
        %744 = vmatpush.msra.mxu0 %v677
        %745 = vmatpush.msra.mxu0 %v676
        %746 = vmatpush.msra.mxu0 %v675
        %747 = vmatpush.msra.mxu0 %v674
        %748 = vmatpush.msra.mxu0 %v673
        %749 = vmatpush.msra.mxu0 %v672
        %750 = vmatpush.msra.mxu0 %v671
        %751 = vmatpush.msra.mxu0 %v670
        %752 = vmatpush.msra.mxu0 %v669
        %753 = vmatpush.msra.mxu0 %v668
        %754 = vmatmul.f32.gmra.mxu0 %v722
        %v755 = vpop.f32.mrf.mxu0
        %v756 = vadd.f32 0.0, %v755
        %757 = vdwg.mxu0
        %758 = vmatpush.msra.mxu0 0.0
        %759 = vmatpush.msra.mxu0 0.0
        %760 = vmatpush.msra.mxu0 0.0
        %761 = vmatpush.msra.mxu0 0.0
        %762 = vmatpush.msra.mxu0 0.0
        %763 = vmatpush.msra.mxu0 0.0
        %764 = vmatpush.msra.mxu0 0.0
        %765 = vmatpush.msra.mxu0 %v736
        %766 = vmatpush.msra.mxu0 %v691
        %767 = vmatpush.msra.mxu0 %v690
        %768 = vmatpush.msra.mxu0 %v689
        %769 = vmatpush.msra.mxu0 %v688
        %770 = vmatpush.msra.mxu0 %v687
        %771 = vmatpush.msra.mxu0 %v686
        %772 = vmatpush.msra.mxu0 %v685
        %773 = vmatpush.msra.mxu0 %v684
        %774 = vmatmul.f32.gmra.mxu0 %v732
        %v775 = vpop.f32.mrf.mxu0
        %v776 = vadd.f32 %v756, %v775
        %777 = vdwg.mxu0
        %v778 = vld [vmem:[#allocation2] sm:$0xff]
        %v779 = vld [vmem:[#allocation2 + $0x8] sm:$0xff]
        %v780 = vld [vmem:[#allocation2 + $0x10] sm:$0xff]
        %v781 = vld [vmem:[#allocation2 + $0x18] sm:$0xff]
        %v782 = vld [vmem:[#allocation2 + $0x20] sm:$0xff]
        %v783 = vld [vmem:[#allocation2 + $0x28] sm:$0xff]
        %v784 = vld [vmem:[#allocation2 + $0x30] sm:$0xff]
        %v785 = vld [vmem:[#allocation2 + $0x38] sm:$0xff]
        %v786 = vld [vmem:[#allocation2 + $0x40] sm:$0xff]
        %v787 = vld [vmem:[#allocation2 + $0x48] sm:$0xff]
        %v788 = vld [vmem:[#allocation2 + $0x50] sm:$0xff]
        %v789 = vld [vmem:[#allocation2 + $0x58] sm:$0xff]
        %v790 = vld [vmem:[#allocation2 + $0x60] sm:$0xff]
        %v791 = vld [vmem:[#allocation2 + $0x68] sm:$0xff]
        %v792 = vld [vmem:[#allocation2 + $0x70] sm:$0xff]
        %v793 = vld [vmem:[#allocation2 + $0x78] sm:$0xff]
        %v794 = vld [vmem:[#allocation2 + $0x80] sm:$0xff]
        %v795 = vld [vmem:[#allocation2 + $0x88] sm:$0xff]
        %v796 = vld [vmem:[#allocation2 + $0x90] sm:$0xff]
        %v797 = vld [vmem:[#allocation2 + $0x98] sm:$0xff]
        %v798 = vld [vmem:[#allocation2 + $0xa0] sm:$0xff]
        %v799 = vld [vmem:[#allocation2 + $0xa8] sm:$0xff]
        %v800 = vld [vmem:[#allocation2 + $0xb0] sm:$0xff]
        %v801 = vld [vmem:[#allocation2 + $0xb8] sm:$0xff]
        %v802 = vld [vmem:[#allocation2 + $0xc0] sm:$0xff]
        %v803 = vld [vmem:[#allocation2 + $0xc8] sm:$0xff]
        %v804 = vld [vmem:[#allocation2 + $0xd0] sm:$0xff]
        %v805 = vld [vmem:[#allocation2 + $0xd8] sm:$0xff]
        %v806 = vld [vmem:[#allocation2 + $0xe0] sm:$0xff]
        %v807 = vld [vmem:[#allocation2 + $0xe8] sm:$0xff]
        %v808 = vld [vmem:[#allocation2 + $0xf0] sm:$0xff]
        %v809 = vld [vmem:[#allocation2 + $0xf8] sm:$0xff]
        %v810 = vld [vmem:[#allocation2 + $0x100] sm:$0xff]
        %v811 = vld [vmem:[#allocation2 + $0x108] sm:$0xff]
        %v812 = vld [vmem:[#allocation2 + $0x110] sm:$0xff]
        %v813 = vld [vmem:[#allocation2 + $0x118] sm:$0xff]
        %v814 = vld [vmem:[#allocation2 + $0x120] sm:$0xff]
        %v815 = vld [vmem:[#allocation2 + $0x128] sm:$0xff]
        %v816 = vld [vmem:[#allocation2 + $0x130] sm:$0xff]
        %v817 = vld [vmem:[#allocation2 + $0x138] sm:$0xff]
        %v818 = vld [vmem:[#allocation2 + $0x140] sm:$0xff]
        %v819 = vld [vmem:[#allocation2 + $0x148] sm:$0xff]
        %v820 = vld [vmem:[#allocation2 + $0x150] sm:$0xff]
        %v821 = vld [vmem:[#allocation2 + $0x158] sm:$0xff]
        %v822 = vld [vmem:[#allocation2 + $0x160] sm:$0xff]
        %v823 = vld [vmem:[#allocation2 + $0x168] sm:$0xff]
        %v824 = vld [vmem:[#allocation2 + $0x170] sm:$0xff]
        %v825 = vld [vmem:[#allocation2 + $0x178] sm:$0xff]
        %v826 = vld [vmem:[#allocation2 + $0x180] sm:$0xf]
        %v827 = vld [vmem:[#allocation2 + $0x188] sm:$0xf]
        %v844 = vsel %vm709, %v576, %v562
        %v845 = vsel %vm711, %v590, %v844
        %v846 = vsel %vm713, %v604, %v845
        %v847 = vsel %vm715, %v618, %v846
        %v848 = vsel %vm717, %v632, %v847
        %v849 = vsel %vm719, %v646, %v848
        %v850 = vsel %vm721, %v660, %v849
        %v851 = vsel %vm709, %v583, %v569
        %v852 = vsel %vm711, %v597, %v851
        %v853 = vsel %vm713, %v611, %v852
        %v854 = vsel %vm715, %v625, %v853
        %v855 = vsel %vm717, %v639, %v854
        %v856 = vsel %vm719, %v653, %v855
        %v857 = vsel %vm721, %v667, %v856
        %v859 = vsel %vm731, %v857, 0
        %v862 = vsel %vm734, %v826, 0
        %v865 = vsel %vm734, %v827, 0
        %867 = vmatpush.msra.mxu0 %v808
        %868 = vmatpush.msra.mxu0 %v806
        %869 = vmatpush.msra.mxu0 %v804
        %870 = vmatpush.msra.mxu0 %v802
        %871 = vmatpush.msra.mxu0 %v800
        %872 = vmatpush.msra.mxu0 %v798
        %873 = vmatpush.msra.mxu0 %v796
        %874 = vmatpush.msra.mxu0 %v794
        %875 = vmatpush.msra.mxu0 %v792
        %876 = vmatpush.msra.mxu0 %v790
        %877 = vmatpush.msra.mxu0 %v788
        %878 = vmatpush.msra.mxu0 %v786
        %879 = vmatpush.msra.mxu0 %v784
        %880 = vmatpush.msra.mxu0 %v782
        %881 = vmatpush.msra.mxu0 %v780
        %882 = vmatpush.msra.mxu0 %v778
        %883 = vmatmul.f32.gmra.mxu0 %v850
        %v884 = vpop.f32.mrf.mxu0
        %v885 = vadd.f32 0.0, %v884
        %886 = vdwg.mxu0
        %887 = vmatpush.msra.mxu0 0.0
        %888 = vmatpush.msra.mxu0 0.0
        %889 = vmatpush.msra.mxu0 0.0
        %890 = vmatpush.msra.mxu0 0.0
        %891 = vmatpush.msra.mxu0 0.0
        %892 = vmatpush.msra.mxu0 0.0
        %893 = vmatpush.msra.mxu0 0.0
        %894 = vmatpush.msra.mxu0 %v862
        %895 = vmatpush.msra.mxu0 %v824
        %896 = vmatpush.msra.mxu0 %v822
        %897 = vmatpush.msra.mxu0 %v820
        %898 = vmatpush.msra.mxu0 %v818
        %899 = vmatpush.msra.mxu0 %v816
        %900 = vmatpush.msra.mxu0 %v814
        %901 = vmatpush.msra.mxu0 %v812
        %902 = vmatpush.msra.mxu0 %v810
        %903 = vmatmul.f32.gmra.mxu0 %v859
        %v904 = vpop.f32.mrf.mxu0
        %v905 = vadd.f32 %v885, %v904
        %906 = vdwg.mxu0
        %907 = vmatpush.msra.mxu0 %v809
        %908 = vmatpush.msra.mxu0 %v807
        %909 = vmatpush.msra.mxu0 %v805
        %910 = vmatpush.msra.mxu0 %v803
        %911 = vmatpush.msra.mxu0 %v801
        %912 = vmatpush.msra.mxu0 %v799
        %913 = vmatpush.msra.mxu0 %v797
        %914 = vmatpush.msra.mxu0 %v795
        %915 = vmatpush.msra.mxu0 %v793
        %916 = vmatpush.msra.mxu0 %v791
        %917 = vmatpush.msra.mxu0 %v789
        %918 = vmatpush.msra.mxu0 %v787
        %919 = vmatpush.msra.mxu0 %v785
        %920 = vmatpush.msra.mxu0 %v783
        %921 = vmatpush.msra.mxu0 %v781
        %922 = vmatpush.msra.mxu0 %v779
        %923 = vmatmul.f32.gmra.mxu0 %v850
        %v924 = vpop.f32.mrf.mxu0
        %v925 = vadd.f32 0.0, %v924
        %926 = vdwg.mxu0
        %927 = vmatpush.msra.mxu0 0.0
        %928 = vmatpush.msra.mxu0 0.0
        %929 = vmatpush.msra.mxu0 0.0
        %930 = vmatpush.msra.mxu0 0.0
        %931 = vmatpush.msra.mxu0 0.0
        %932 = vmatpush.msra.mxu0 0.0
        %933 = vmatpush.msra.mxu0 0.0
        %934 = vmatpush.msra.mxu0 %v865
        %935 = vmatpush.msra.mxu0 %v825
        %936 = vmatpush.msra.mxu0 %v823
        %937 = vmatpush.msra.mxu0 %v821
        %938 = vmatpush.msra.mxu0 %v819
        %939 = vmatpush.msra.mxu0 %v817
        %940 = vmatpush.msra.mxu0 %v815
        %941 = vmatpush.msra.mxu0 %v813
        %942 = vmatpush.msra.mxu0 %v811
        %943 = vmatmul.f32.gmra.mxu0 %v859
        %v944 = vpop.f32.mrf.mxu0
        %v945 = vadd.f32 %v925, %v944
        %946 = vdwg.mxu0
        %948 = vrot.lane.b32.xlu0 %v905, 79
        %v949 = vpop.permute.xlu0 %948
        %v951 = vmax.f32 %v905, %v949
        %953 = vrot.lane.b32.xlu0 %v945, 79
        %v954 = vpop.permute.xlu0 %953
        %v956 = vmax.f32 %v905, %v954
        %v957 = vmax.f32 %v945, %v954
        %960 = vrot.lane.b32.xlu0 %v956, 30
        %v961 = vpop.permute.xlu0 %960
        %962 = vrot.lane.b32.xlu0 %v957, 30
        %v963 = vpop.permute.xlu0 %962
        %vm964 = vcmask 244736
        %v965 = vsel %vm964, %v961, %v963
        %v967 = vmax.f32 %v951, %v965
        %v968 = vld [vmem:[%s4] sm:$0x3]
        %v969 = vstv %s341
        %vm970 = vcmask 64512
        %v972 = vsel %vm970, %v968, 0
        %974 = vmatpush.msra.mxu0 0.0
        %975 = vmatpush.msra.mxu0 0.0
        %976 = vmatpush.msra.mxu0 0.0
        %977 = vmatpush.msra.mxu0 0.0
        %978 = vmatpush.msra.mxu0 0.0
        %979 = vmatpush.msra.mxu0 0.0
        %980 = vmatpush.msra.mxu0 0.0
        %981 = vmatpush.msra.mxu0 0.0
        %982 = vmatpush.msra.mxu0 0.0
        %983 = vmatpush.msra.mxu0 0.0
        %984 = vmatpush.msra.mxu0 0.0
        %985 = vmatpush.msra.mxu0 0.0
        %986 = vmatpush.msra.mxu0 0.0
        %987 = vmatpush.msra.mxu0 0.0
        %988 = vmatpush.msra.mxu0 0.0
        %989 = vmatpush.msra.mxu0 %v776
        %990 = vmatmul.f32.gmra.mxu0 %v972
        %v991 = vpop.f32.mrf.mxu0
        %v992 = vadd.f32 %v969, %v991
        %993 = vdwg.mxu0
        %v994 = vmax.f32 %v992, 0.0
        %995 = vmatpush.msra.mxu0 0.0
        %996 = vmatpush.msra.mxu0 0.0
        %997 = vmatpush.msra.mxu0 0.0
        %998 = vmatpush.msra.mxu0 0.0
        %999 = vmatpush.msra.mxu0 0.0
        %1000 = vmatpush.msra.mxu0 0.0
        %1001 = vmatpush.msra.mxu0 0.0
        %1002 = vmatpush.msra.mxu0 0.0
        %1003 = vmatpush.msra.mxu0 0.0
        %1004 = vmatpush.msra.mxu0 0.0
        %1005 = vmatpush.msra.mxu0 0.0
        %1006 = vmatpush.msra.mxu0 0.0
        %1007 = vmatpush.msra.mxu0 0.0
        %1008 = vmatpush.msra.mxu0 0.0
        %1009 = vmatpush.msra.mxu0 0.0
        %1010 = vmatpush.msra.mxu0 %v967
        %1011 = vmatmul.f32.gmra.mxu0 %v972
        %v1012 = vpop.f32.mrf.mxu0
        %v1013 = vadd.f32 %v969, %v1012
        %1014 = vdwg.mxu0
        %v1015 = vmax.f32 %v1013, 0.0
        %v1016 = vstv %s342
        %v1017 = vmul.f32 %v1016, %v994
        %v1018 = vstv %s343
        %v1019 = vmul.f32 %v1018, %v1015
        %v1020 = vadd.f32 %v1017, %v1019
        %v1021 = vld [vmem:[%s3] sm:$0xff]
        %v1022 = vld [vmem:[%s3 + $0x8] sm:$0xff]
        %v1023 = vld [vmem:[%s3 + $0x10] sm:$0xff]
        %v1024 = vld [vmem:[%s3 + $0x18] sm:$0xff]
        %v1025 = vld [vmem:[%s3 + $0x20] sm:$0xff]
        %v1026 = vld [vmem:[%s3 + $0x28] sm:$0xff]
        %v1027 = vld [vmem:[%s3 + $0x30] sm:$0xff]
        %v1028 = vld [vmem:[%s3 + $0x38] sm:$0xff]
        %v1029 = vld [vmem:[%s3 + $0x40] sm:$0xff]
        %v1030 = vld [vmem:[%s3 + $0x48] sm:$0xff]
        %v1031 = vld [vmem:[%s3 + $0x50] sm:$0xff]
        %v1032 = vld [vmem:[%s3 + $0x58] sm:$0xff]
        %v1033 = vld [vmem:[%s3 + $0x60] sm:$0x1]
        %v1034 = vld [vmem:[%s3 + $0x68] sm:$0x1]
        %vm1035 = vcmask 400384
        %v1037 = vsel %vm1035, %v1020, 0
        %vm1039 = vcmask 1040384
        %v1041 = vsel %vm1039, %v1033, 0
        %v1044 = vsel %vm1039, %v1034, 0
        %1046 = vmatpush.msra.mxu0 0.0
        %1047 = vmatpush.msra.mxu0 0.0
        %1048 = vmatpush.msra.mxu0 0.0
        %1049 = vmatpush.msra.mxu0 0.0
        %1050 = vmatpush.msra.mxu0 0.0
        %1051 = vmatpush.msra.mxu0 0.0
        %1052 = vmatpush.msra.mxu0 0.0
        %1053 = vmatpush.msra.mxu0 0.0
        %1054 = vmatpush.msra.mxu0 0.0
        %1055 = vmatpush.msra.mxu0 %v1041
        %1056 = vmatpush.msra.mxu0 %v1031
        %1057 = vmatpush.msra.mxu0 %v1029
        %1058 = vmatpush.msra.mxu0 %v1027
        %1059 = vmatpush.msra.mxu0 %v1025
        %1060 = vmatpush.msra.mxu0 %v1023
        %1061 = vmatpush.msra.mxu0 %v1021
        %1062 = vmatmul.f32.gmra.mxu0 %v1037
        %v1063 = vpop.f32.mrf.mxu0
        %v1064 = vadd.f32 0.0, %v1063
        %1065 = vdwg.mxu0
        %1066 = vmatpush.msra.mxu0 0.0
        %1067 = vmatpush.msra.mxu0 0.0
        %1068 = vmatpush.msra.mxu0 0.0
        %1069 = vmatpush.msra.mxu0 0.0
        %1070 = vmatpush.msra.mxu0 0.0
        %1071 = vmatpush.msra.mxu0 0.0
        %1072 = vmatpush.msra.mxu0 0.0
        %1073 = vmatpush.msra.mxu0 0.0
        %1074 = vmatpush.msra.mxu0 0.0
        %1075 = vmatpush.msra.mxu0 %v1044
        %1076 = vmatpush.msra.mxu0 %v1032
        %1077 = vmatpush.msra.mxu0 %v1030
        %1078 = vmatpush.msra.mxu0 %v1028
        %1079 = vmatpush.msra.mxu0 %v1026
        %1080 = vmatpush.msra.mxu0 %v1024
        %1081 = vmatpush.msra.mxu0 %v1022
        %1082 = vmatmul.f32.gmra.mxu0 %v1037
        %v1083 = vpop.f32.mrf.mxu0
        %v1084 = vadd.f32 0.0, %v1083
        %1085 = vdwg.mxu0
        %v1086 = vld [vmem:[%s5] sm:$0xff]
        %v1087 = vld [vmem:[%s6] sm:$0xff]
        %1089 = vset.pattern.permute.xlu0 0
        %1090 = vperm.xlu0 %1089, %v1087
        %v1091 = vpop.permute.xlu0 %1090
        %vm1093 = vcmask 15360
        %v1095 = vsel %vm1093, %v1086, 0
        %v1098 = vsel %vm401, %v1064, 0
        %v1101 = vsel %vm401, %v1084, 0
        %1103 = vmatpush.msra.mxu0 0.0
        %1104 = vmatpush.msra.mxu0 0.0
        %1105 = vmatpush.msra.mxu0 0.0
        %1106 = vmatpush.msra.mxu0 0.0
        %1107 = vmatpush.msra.mxu0 0.0
        %1108 = vmatpush.msra.mxu0 0.0
        %1109 = vmatpush.msra.mxu0 0.0
        %1110 = vmatpush.msra.mxu0 0.0
        %1111 = vmatpush.msra.mxu0 0.0
        %1112 = vmatpush.msra.mxu0 0.0
        %1113 = vmatpush.msra.mxu0 0.0
        %1114 = vmatpush.msra.mxu0 0.0
        %1115 = vmatpush.msra.mxu0 0.0
        %1116 = vmatpush.msra.mxu0 0.0
        %1117 = vmatpush.msra.mxu0 0.0
        %1118 = vmatpush.msra.mxu0 %v1098
        %1119 = vmatmul.f32.gmra.mxu0 %v1095
        %v1120 = vpop.f32.mrf.mxu0
        %v1121 = vadd.f32 %v1091, %v1120
        %1122 = vdwg.mxu0
        %1123 = vmatpush.msra.mxu0 0.0
        %1124 = vmatpush.msra.mxu0 0.0
        %1125 = vmatpush.msra.mxu0 0.0
        %1126 = vmatpush.msra.mxu0 0.0
        %1127 = vmatpush.msra.mxu0 0.0
        %1128 = vmatpush.msra.mxu0 0.0
        %1129 = vmatpush.msra.mxu0 0.0
        %1130 = vmatpush.msra.mxu0 0.0
        %1131 = vmatpush.msra.mxu0 0.0
        %1132 = vmatpush.msra.mxu0 0.0
        %1133 = vmatpush.msra.mxu0 0.0
        %1134 = vmatpush.msra.mxu0 0.0
        %1135 = vmatpush.msra.mxu0 0.0
        %1136 = vmatpush.msra.mxu0 0.0
        %1137 = vmatpush.msra.mxu0 0.0
        %1138 = vmatpush.msra.mxu0 %v1101
        %1139 = vmatmul.f32.gmra.mxu0 %v1095
        %v1140 = vpop.f32.mrf.mxu0
        %v1141 = vadd.f32 %v1091, %v1140
        %1142 = vdwg.mxu0
        %v1143 = vmul.f32 %v1121, 0.5
        %v1144 = vmul.f32 %v1141, 0.5
        %v1145 = vtanh.pop %v1143
        %v1146 = vtanh.pop %v1144
        %v1147 = vmul.f32 %v1145, 0.5
        %v1148 = vmul.f32 %v1146, 0.5
        %v1149 = vadd.f32 %v1147, 1.5
        %v1150 = vadd.f32 %v1148, 1.5
        %v1153 = vrot.slane %v1150, 7
        %v1154 = vsel %vm1039, %v1149, %v1153
        %v1155 = vsel %vm709, %v1149, %v1153
        %v1156 = vrot.slane %v1155, 1
        %v1157 = vsel %vm711, %v1149, %v1153
        %v1158 = vrot.slane %v1157, 2
        %v1159 = vsel %vm713, %v1149, %v1153
        %v1160 = vrot.slane %v1159, 3
        %v1161 = vsel %vm715, %v1149, %v1153
        %v1162 = vrot.slane %v1161, 4
        %v1163 = vsel %vm717, %v1149, %v1153
        %v1164 = vrot.slane %v1163, 5
        %v1165 = vsel %vm719, %v1149, %v1153
        %v1166 = vrot.slane %v1165, 6
        %vm1167 = vcmask 1046528
        %v1168 = vsel %vm1167, %v1153, %v1149
        %v1169 = vrot.slane %v1168, 7
        %v1170 = vperm.slane %v1154, 0
        %v1171 = vperm.slane %v1154, 1
        %v1172 = vperm.slane %v1156, 0
        %v1173 = vperm.slane %v1156, 1
        %v1174 = vperm.slane %v1158, 0
        %v1175 = vperm.slane %v1158, 1
        %v1176 = vperm.slane %v1160, 0
        %v1177 = vperm.slane %v1160, 1
        %v1178 = vperm.slane %v1162, 0
        %v1179 = vperm.slane %v1162, 1
        %v1180 = vperm.slane %v1164, 0
        %v1181 = vperm.slane %v1164, 1
        %v1182 = vperm.slane %v1166, 0
        %v1183 = vperm.slane %v1166, 1
        %v1184 = vperm.slane %v1169, 0
        %v1185 = vperm.slane %v1169, 1
        %v1186 = vrot.slane %v1171, 6
        %v1187 = vrot.slane %v1173, 6
        %v1188 = vrot.slane %v1175, 6
        %v1189 = vrot.slane %v1177, 6
        %v1190 = vrot.slane %v1179, 6
        %v1191 = vrot.slane %v1181, 6
        %v1192 = vrot.slane %v1183, 6
        %v1193 = vrot.slane %v1185, 6
        %v1194 = vsel %vm401, %v1170, %v1186
        %v1195 = vsel %vm401, %v1172, %v1187
        %v1196 = vsel %vm401, %v1174, %v1188
        %v1197 = vsel %vm401, %v1176, %v1189
        %v1198 = vsel %vm401, %v1178, %v1190
        %v1199 = vsel %vm401, %v1180, %v1191
        %v1200 = vsel %vm401, %v1182, %v1192
        %v1201 = vsel %vm401, %v1184, %v1193
        %v1210 = vmul.f32 %v344, %v1194
        %v1211 = vmul.f32 %v345, %v1195
        %v1212 = vmul.f32 %v346, %v1196
        %v1213 = vmul.f32 %v347, %v1197
        %v1214 = vmul.f32 %v348, %v1198
        %v1215 = vmul.f32 %v349, %v1199
        %v1216 = vmul.f32 %v350, %v1200
        %v1217 = vmul.f32 %v351, %v1201
        %vm1218 = vcmask 551938
        %vm1219 = vmor %vm1218, %vm401
        %1220 = vst.msk [vmem:[%s332] sm:$0xf] %vm1219, %v1210
        %1221 = vst.msk [vmem:[%s332 + $0x4] sm:$0xf] %vm1219, %v1211
        %1222 = vst.msk [vmem:[%s332 + $0x8] sm:$0xf] %vm1219, %v1212
        %1223 = vst.msk [vmem:[%s332 + $0xc] sm:$0xf] %vm1219, %v1213
        %1224 = vst.msk [vmem:[%s332 + $0x10] sm:$0xf] %vm1219, %v1214
        %1225 = vst.msk [vmem:[%s332 + $0x14] sm:$0xf] %vm1219, %v1215
        %1226 = vst.msk [vmem:[%s332 + $0x18] sm:$0xf] %vm1219, %v1216
        %1227 = vst.msk [vmem:[%s332 + $0x1c] sm:$0xf] %vm1219, %v1217
        %s1228 = sand.u32 %s205, 1
        %s1229 = scalar_lea.sflag [#allocation4], %s1228
        %s1230 = sand.u32 %s205, 1
        %s1231 = smul.addr %s1230, 32
        %s1232 = scalar_lea.vmem [#allocation7], %s1231
        // Predicated region
        $region61: #{tpu_custom_call.1} parent=51 // pred_check
          %p1233 = pneg %p215
        $region62: #{tpu_custom_call.1} parent=51 // pred_check_branch
          %1235 = sbr.rel (%p1233) target = $region64
        $region63: #{tpu_custom_call.1} parent=51 // pred_region
          %s1236 = smul.u32 8, %s24
          %1238 = vsyncadd %s1229, 0
          %s1239 = smul.addr %s1236, 2
          %s1240 = smul.addr %s1239, 2
          %s1241 = scalar_lea.hbm %s8, %s1240
          %s1242 = sshll.u32 %s1232, 4
          %s1243 = int_to_ptr.vmem [resolvable:$true] %s1242
          %s1244 = sshll.u32 %s1241, 4
          %s1245 = int_to_ptr.hbm [resolvable:$true] %s1244
          %1250 = dma.vmem_to_hbm [thread:$0]  %s1243, 512, %s1245, %s1229, 64, 64, 4
        $region64: #{tpu_custom_call.1} parent=51 // pred_fallthru
          _
      $region52: #{tpu_custom_call.1} parent=5 // pred_fallthru
        _
      %p1251 = scmp.le.s32.totalorder 2, %s19
      // Predicated region
      $region65: #{tpu_custom_call.1} parent=5 // pred_check
        %p1252 = pneg %p1251
      $region66: #{tpu_custom_call.1} parent=5 // pred_check_branch
        %1254 = sbr.rel (%p1252) target = $region68
      $region67: #{tpu_custom_call.1} parent=5 // pred_region
        %s1255 = ssub.s32 %s19, 2
        // Predicated region
        $region69: #{tpu_custom_call.1} parent=67 // pred_check
          %p1256 = pneg %p221
        $region70: #{tpu_custom_call.1} parent=67 // pred_check_branch
          %1258 = sbr.rel (%p1256) target = $region72
        $region71: #{tpu_custom_call.1} parent=67 // pred_region
          %s1259 = sand.u32 %s206, 1
          %s1260 = scalar_lea.sflag [#allocation4], %s1259
          %s1261 = sand.u32 %s206, 1
          %s1262 = smul.addr %s1261, 32
          %s1263 = scalar_lea.vmem [#allocation7], %s1262
          %1265 = dma.done %s1260, 512
        $region72: #{tpu_custom_call.1} parent=67 // pred_fallthru
          _
      $region68: #{tpu_custom_call.1} parent=5 // pred_fallthru
        _
    $region6: #{tpu_custom_call.1} parent=1 // loop_footer
      %s23 = sadd.s32 1, %s19
    $region7: #{tpu_custom_call.1} parent=1 // loop_footer_branch
      %18 = sbr.rel target = $region3
    $region8: #{tpu_custom_call.1} parent=1 // loop_exit
      _
    %1266 = vsyncpa [#allocation3], 1
    %s1267 = scalar_lea.sflag [#allocation3], 1
    %1268 = vsyncpa %s1267, 1
    %1269 = vsyncpa [#allocation4], 1
    %s1270 = scalar_lea.sflag [#allocation4], 1
    %1271 = vsyncpa %s1270, 1
    %1272 = vsyncpa [#allocation5], 1
    %s1273 = scalar_lea.sflag [#allocation5], 1
    %1274 = vsyncpa %s1273, 1

</llo_original>
